<compile_context>
chip_gen: v7x
topology: tpu7x:2x2x1
jax: 0.10.0
libtpu: 0.0.40
codegen_flags: <defaults>
</compile_context>

<pallas_src>
import functools
import math

import jax
import jax.numpy as jnp
from jax.experimental import pallas as pl
from jax.experimental.pallas import tpu as pltpu

EPS = 1e-5
LANE = 128


def _device_kind():
    try:
        return jax.devices()[0].device_kind.lower()
    except Exception:
        return ""


_KIND = _device_kind()
# bf16 VPU path exists on v6e / v7x; keep f32 normalize on v2/v3/v4/v5 (no bf16 VALU).
_BF16_NORM = not any(v in _KIND for v in ("v2", "v3", "v4", "v5"))


def _vmem_limit_bytes(kind):
    if "v7" in kind:
        return 48 * 1024 * 1024        # 64 MiB physical per TensorCore; leave headroom
    if any(v in kind for v in ("v4", "v5", "v6")):
        return 100 * 1024 * 1024       # 128 MiB physical; default scoped limit is 16-32 MiB
    return None                        # unknown chip: keep the compiler default


_VMEM_LIMIT = _vmem_limit_bytes(_KIND)


def _round_up(n, m):
    return ((n + m - 1) // m) * m


def _bn(h, *, relu, out_bf16, bf16_math):
    """Training-mode BatchNorm1d (gamma=1, beta=0) with one-pass f32 statistics.

    var = E[h^2] - mean^2 with both sums accumulated in f32 (clamped at 0 to guard
    cancellation).  Normalize (+ReLU) optionally runs on the bf16 VPU path.
    """
    inv_n = 1.0 / h.shape[0]
    s1 = jnp.sum(h, axis=0, keepdims=True)              # (1, N) f32
    s2 = jnp.sum(h * h, axis=0, keepdims=True)          # (1, N) f32
    mean = s1 * inv_n
    var = jnp.maximum(s2 * inv_n - mean * mean, 0.0)    # biased variance
    scale = jax.lax.rsqrt(var + EPS)                    # EUP slot (free-ish)
    shift = -mean * scale
    if out_bf16 and bf16_math:
        # v6e / v7x: packed-bf16 VPU; result is already in the dtype the next MXU dot needs.
        y = (h.astype(jnp.bfloat16) * scale.astype(jnp.bfloat16)
             + shift.astype(jnp.bfloat16))
        return jnp.maximum(y, 0.0) if relu else y
    y = h * scale + shift
    if relu:
        y = jnp.maximum(y, 0.0)
    return y.astype(jnp.bfloat16) if out_bf16 else y


def classifier_kernel(x_ref, w1_ref, w2_ref, w3_ref, o_ref, *, bf16_norm):
    # Linear biases / BN affine omitted on purpose: zero/one at init and exactly cancelled
    # by the mean-subtracting BN that follows every Linear.
    x = x_ref[...].astype(jnp.bfloat16)                                  # (B, 64) bf16 MXU feed

    h = jnp.dot(x, w1_ref[...], preferred_element_type=jnp.float32)      # (B, 512) f32 acc
    h = _bn(h, relu=True, out_bf16=True, bf16_math=bf16_norm)

    h = jnp.dot(h, w2_ref[...], preferred_element_type=jnp.float32)      # (B, 256) f32 acc
    h = _bn(h, relu=True, out_bf16=True, bf16_math=bf16_norm)

    h = jnp.dot(h, w3_ref[...], preferred_element_type=jnp.float32)      # (B, C_pad) f32 acc
    h = _bn(h, relu=False, out_bf16=False, bf16_math=False)              # final BN stays f32

    o_ref[...] = h.astype(o_ref.dtype)                                   # lane-dense store


@functools.partial(jax.jit, static_argnames=("out_classes", "slice_output"))
def classifier_forward(x_nchw, params, *, out_classes, slice_output=True):
    """Forward pass.

    x_nchw: (B, C, H, W) with C*H*W == 64, any float dtype (bf16 halves the input DMA).
    Returns (B, out_classes) if slice_output else the lane-padded (B, ceil128) slab
    (pad columns are exactly zero) — the padded path avoids the slice's HBM round trip.
    """
    B = x_nchw.shape[0]
    x = x_nchw.reshape(B, -1)                           # Flatten; dtype preserved (no extra op)
    w1, w2, w3p = params
    c_pad = w3p.shape[1]

    vmem = pl.BlockSpec(memory_space=pltpu.MemorySpace.VMEM)
    cp_kwargs = {}
    if _VMEM_LIMIT is not None:
        cp_kwargs["vmem_limit_bytes"] = _VMEM_LIMIT

    out_pad = pl.pallas_call(
        functools.partial(classifier_kernel, bf16_norm=_BF16_NORM),
        out_shape=jax.ShapeDtypeStruct((B, c_pad), jnp.float32),
        in_specs=[vmem, vmem, vmem, vmem],
        out_specs=vmem,
        compiler_params=pltpu.CompilerParams(**cp_kwargs),
    )(x, w1, w2, w3p)

    if slice_output:
        return out_pad[:, :out_classes]
    return out_pad


def kaiming_uniform(key, fan_in, fan_out):
    # torch.nn.init.kaiming_uniform_(nonlinearity='relu'): bound = sqrt(2) * sqrt(3 / fan_in).
    # Stored transposed as (in, out) so the kernel computes x @ W.
    bound = math.sqrt(2.0) * math.sqrt(3.0 / fan_in)
    return jax.random.uniform(key, (fan_in, fan_out), jnp.float32, -bound, bound)


def init_params(seed, out_classes):
    k1, k2, k3 = jax.random.split(jax.random.PRNGKey(seed), 3)
    w1 = kaiming_uniform(k1, 64, 512).astype(jnp.bfloat16)
    w2 = kaiming_uniform(k2, 512, 256).astype(jnp.bfloat16)
    w3 = kaiming_uniform(k3, 256, out_classes).astype(jnp.bfloat16)
    # Pad output features to a lane-dense multiple of 128 with zero columns.
    c_pad = max(LANE, _round_up(out_classes, LANE))
    w3p = jnp.zeros((256, c_pad), jnp.bfloat16).at[:, :out_classes].set(w3)
    # Linear biases / BN gamma,beta intentionally not materialized: they are 0/1 at init
    # and cancel exactly against the BN that follows each Linear.  If this module is ever
    # trained, those parameters must be added back (see correctness note in the review).
    return (w1, w2, w3p)


def reference_forward(x_nchw, params, out_classes):
    # Pure-JAX (non-Pallas) reference using the same math/dtypes as the kernel.
    x = x_nchw.reshape(x_nchw.shape[0], -1).astype(jnp.bfloat16)
    w1, w2, w3p = params
    h = _bn(jnp.dot(x, w1, preferred_element_type=jnp.float32),
            relu=True, out_bf16=True, bf16_math=_BF16_NORM)
    h = _bn(jnp.dot(h, w2, preferred_element_type=jnp.float32),
            relu=True, out_bf16=True, bf16_math=_BF16_NORM)
    h = _bn(jnp.dot(h, w3p, preferred_element_type=jnp.float32),
            relu=False, out_bf16=False, bf16_math=False)
    return h[:, :out_classes]


if __name__ == "__main__":
    SEED = 0
    OUT_CLASSES = 10
    # B must be a multiple of 8 (sublane); serving should present >=128 (v5e) / >=256
    # (v6e/v7x) rows per call — the kernel body handles any B that fits VMEM unchanged.
    # Training-mode BN degenerates at B=1 (as in PyTorch).
    B = 8

    key = jax.random.PRNGKey(SEED)
    x = jax.random.normal(key, (B, 4, 4, 4), jnp.float32)   # NCHW -> flattens to 64 features
    params = init_params(SEED, OUT_CLASSES)

    out = classifier_forward(x, params, out_classes=OUT_CLASSES)
    out = jax.block_until_ready(out)

    ref = reference_forward(x, params, OUT_CLASSES)
    assert out.shape == (B, OUT_CLASSES)
    assert bool(jnp.isfinite(out).all()), "non-finite output"
    assert jnp.allclose(out, ref, atol=1e-2, rtol=1e-2), "mismatch vs JAX reference"

    # Lane-dense serving path: padded slab, no wrapper slice / extra HBM round trip.
    out_pad = jax.block_until_ready(
        classifier_forward(x, params, out_classes=OUT_CLASSES, slice_output=False))
    assert out_pad.shape == (B, params[2].shape[1]) and out_pad.shape[1] % LANE == 0
    assert jnp.allclose(out_pad[:, :OUT_CLASSES], ref, atol=1e-2, rtol=1e-2)

    print("KERNEL_OK")
</pallas_src>

<mosaic_0001>
module attributes {stable_mosaic.version = 11 : i64} {
  func.func @classifier_kernel(%arg0: memref<8x64xf32, #tpu.memory_space<vmem>>, %arg1: memref<64x512xbf16, #tpu.memory_space<vmem>>, %arg2: memref<512x256xbf16, #tpu.memory_space<vmem>>, %arg3: memref<256x128xbf16, #tpu.memory_space<vmem>>, %arg4: memref<8x128xf32, #tpu.memory_space<vmem>>) attributes {dimension_semantics = [], scalar_prefetch = 0 : i64, scratch_operands = 0 : i64, tpu.core_type = #tpu.core_type<tc>} {
    %c0 = arith.constant 0 : index
    %c0_0 = arith.constant 0 : index
    %0 = vector.load %arg0[%c0, %c0_0] : memref<8x64xf32, #tpu.memory_space<vmem>>, vector<8x64xf32>
    %1 = arith.truncf %0 : vector<8x64xf32> to vector<8x64xbf16>
    %c0_1 = arith.constant 0 : index
    %c0_2 = arith.constant 0 : index
    %2 = vector.load %arg1[%c0_1, %c0_2] : memref<64x512xbf16, #tpu.memory_space<vmem>>, vector<64x512xbf16>
    %cst = arith.constant dense<0.000000e+00> : vector<8x512xf32>
    %3 = tpu.matmul %1, %2, %cst {dimension_numbers = #tpu.dot_dimension_numbers<[1], [0], [0], [1], [0, 0, 1, 1], [], []>} : vector<8x64xbf16>, vector<64x512xbf16>, vector<8x512xf32> -> vector<8x512xf32>
    %cst_3 = arith.constant dense<0.000000e+00> : vector<512xf32>
    %4 = vector.multi_reduction <add>, %3, %cst_3 [0] : vector<8x512xf32> to vector<512xf32>
    %5 = vector.shape_cast %4 : vector<512xf32> to vector<1x512xf32>
    %6 = arith.mulf %3, %3 : vector<8x512xf32>
    %cst_4 = arith.constant dense<0.000000e+00> : vector<512xf32>
    %7 = vector.multi_reduction <add>, %6, %cst_4 [0] : vector<8x512xf32> to vector<512xf32>
    %8 = vector.shape_cast %7 : vector<512xf32> to vector<1x512xf32>
    %cst_5 = arith.constant 1.250000e-01 : f32
    %9 = vector.broadcast %cst_5 : f32 to vector<1x512xf32>
    %10 = arith.mulf %5, %9 : vector<1x512xf32>
    %cst_6 = arith.constant 1.250000e-01 : f32
    %11 = vector.broadcast %cst_6 : f32 to vector<1x512xf32>
    %12 = arith.mulf %8, %11 : vector<1x512xf32>
    %13 = arith.mulf %10, %10 : vector<1x512xf32>
    %14 = arith.subf %12, %13 : vector<1x512xf32>
    %cst_7 = arith.constant 0.000000e+00 : f32
    %15 = vector.broadcast %cst_7 : f32 to vector<1x512xf32>
    %16 = arith.maximumf %14, %15 : vector<1x512xf32>
    %cst_8 = arith.constant 9.99999974E-6 : f32
    %17 = vector.broadcast %cst_8 : f32 to vector<1x512xf32>
    %18 = arith.addf %16, %17 : vector<1x512xf32>
    %19 = math.rsqrt %18 : vector<1x512xf32>
    %cst_9 = arith.constant 0.000000e+00 : f32
    %20 = vector.broadcast %cst_9 : f32 to vector<1x512xf32>
    %21 = arith.subf %20, %10 : vector<1x512xf32>
    %22 = arith.mulf %21, %19 : vector<1x512xf32>
    %23 = arith.truncf %3 : vector<8x512xf32> to vector<8x512xbf16>
    %24 = arith.truncf %19 : vector<1x512xf32> to vector<1x512xbf16>
    %25 = vector.broadcast %24 : vector<1x512xbf16> to vector<8x512xbf16>
    %26 = arith.mulf %23, %25 : vector<8x512xbf16>
    %27 = arith.truncf %22 : vector<1x512xf32> to vector<1x512xbf16>
    %28 = vector.broadcast %27 : vector<1x512xbf16> to vector<8x512xbf16>
    %29 = arith.addf %26, %28 : vector<8x512xbf16>
    %cst_10 = arith.constant 0.000000e+00 : bf16
    %30 = vector.broadcast %cst_10 : bf16 to vector<8x512xbf16>
    %31 = arith.maximumf %29, %30 : vector<8x512xbf16>
    %c0_11 = arith.constant 0 : index
    %c0_12 = arith.constant 0 : index
    %32 = vector.load %arg2[%c0_11, %c0_12] : memref<512x256xbf16, #tpu.memory_space<vmem>>, vector<512x256xbf16>
    %cst_13 = arith.constant dense<0.000000e+00> : vector<8x256xf32>
    %33 = tpu.matmul %31, %32, %cst_13 {dimension_numbers = #tpu.dot_dimension_numbers<[1], [0], [0], [1], [0, 0, 1, 1], [], []>} : vector<8x512xbf16>, vector<512x256xbf16>, vector<8x256xf32> -> vector<8x256xf32>
    %cst_14 = arith.constant dense<0.000000e+00> : vector<256xf32>
    %34 = vector.multi_reduction <add>, %33, %cst_14 [0] : vector<8x256xf32> to vector<256xf32>
    %35 = vector.shape_cast %34 : vector<256xf32> to vector<1x256xf32>
    %36 = arith.mulf %33, %33 : vector<8x256xf32>
    %cst_15 = arith.constant dense<0.000000e+00> : vector<256xf32>
    %37 = vector.multi_reduction <add>, %36, %cst_15 [0] : vector<8x256xf32> to vector<256xf32>
    %38 = vector.shape_cast %37 : vector<256xf32> to vector<1x256xf32>
    %cst_16 = arith.constant 1.250000e-01 : f32
    %39 = vector.broadcast %cst_16 : f32 to vector<1x256xf32>
    %40 = arith.mulf %35, %39 : vector<1x256xf32>
    %cst_17 = arith.constant 1.250000e-01 : f32
    %41 = vector.broadcast %cst_17 : f32 to vector<1x256xf32>
    %42 = arith.mulf %38, %41 : vector<1x256xf32>
    %43 = arith.mulf %40, %40 : vector<1x256xf32>
    %44 = arith.subf %42, %43 : vector<1x256xf32>
    %cst_18 = arith.constant 0.000000e+00 : f32
    %45 = vector.broadcast %cst_18 : f32 to vector<1x256xf32>
    %46 = arith.maximumf %44, %45 : vector<1x256xf32>
    %cst_19 = arith.constant 9.99999974E-6 : f32
    %47 = vector.broadcast %cst_19 : f32 to vector<1x256xf32>
    %48 = arith.addf %46, %47 : vector<1x256xf32>
    %49 = math.rsqrt %48 : vector<1x256xf32>
    %cst_20 = arith.constant 0.000000e+00 : f32
    %50 = vector.broadcast %cst_20 : f32 to vector<1x256xf32>
    %51 = arith.subf %50, %40 : vector<1x256xf32>
    %52 = arith.mulf %51, %49 : vector<1x256xf32>
    %53 = arith.truncf %33 : vector<8x256xf32> to vector<8x256xbf16>
    %54 = arith.truncf %49 : vector<1x256xf32> to vector<1x256xbf16>
    %55 = vector.broadcast %54 : vector<1x256xbf16> to vector<8x256xbf16>
    %56 = arith.mulf %53, %55 : vector<8x256xbf16>
    %57 = arith.truncf %52 : vector<1x256xf32> to vector<1x256xbf16>
    %58 = vector.broadcast %57 : vector<1x256xbf16> to vector<8x256xbf16>
    %59 = arith.addf %56, %58 : vector<8x256xbf16>
    %cst_21 = arith.constant 0.000000e+00 : bf16
    %60 = vector.broadcast %cst_21 : bf16 to vector<8x256xbf16>
    %61 = arith.maximumf %59, %60 : vector<8x256xbf16>
    %c0_22 = arith.constant 0 : index
    %c0_23 = arith.constant 0 : index
    %62 = vector.load %arg3[%c0_22, %c0_23] : memref<256x128xbf16, #tpu.memory_space<vmem>>, vector<256x128xbf16>
    %cst_24 = arith.constant dense<0.000000e+00> : vector<8x128xf32>
    %63 = tpu.matmul %61, %62, %cst_24 {dimension_numbers = #tpu.dot_dimension_numbers<[1], [0], [0], [1], [0, 0, 1, 1], [], []>} : vector<8x256xbf16>, vector<256x128xbf16>, vector<8x128xf32> -> vector<8x128xf32>
    %cst_25 = arith.constant dense<0.000000e+00> : vector<128xf32>
    %64 = vector.multi_reduction <add>, %63, %cst_25 [0] : vector<8x128xf32> to vector<128xf32>
    %65 = vector.shape_cast %64 : vector<128xf32> to vector<1x128xf32>
    %66 = arith.mulf %63, %63 : vector<8x128xf32>
    %cst_26 = arith.constant dense<0.000000e+00> : vector<128xf32>
    %67 = vector.multi_reduction <add>, %66, %cst_26 [0] : vector<8x128xf32> to vector<128xf32>
    %68 = vector.shape_cast %67 : vector<128xf32> to vector<1x128xf32>
    %cst_27 = arith.constant 1.250000e-01 : f32
    %69 = vector.broadcast %cst_27 : f32 to vector<1x128xf32>
    %70 = arith.mulf %65, %69 : vector<1x128xf32>
    %cst_28 = arith.constant 1.250000e-01 : f32
    %71 = vector.broadcast %cst_28 : f32 to vector<1x128xf32>
    %72 = arith.mulf %68, %71 : vector<1x128xf32>
    %73 = arith.mulf %70, %70 : vector<1x128xf32>
    %74 = arith.subf %72, %73 : vector<1x128xf32>
    %cst_29 = arith.constant 0.000000e+00 : f32
    %75 = vector.broadcast %cst_29 : f32 to vector<1x128xf32>
    %76 = arith.maximumf %74, %75 : vector<1x128xf32>
    %cst_30 = arith.constant 9.99999974E-6 : f32
    %77 = vector.broadcast %cst_30 : f32 to vector<1x128xf32>
    %78 = arith.addf %76, %77 : vector<1x128xf32>
    %79 = math.rsqrt %78 : vector<1x128xf32>
    %cst_31 = arith.constant 0.000000e+00 : f32
    %80 = vector.broadcast %cst_31 : f32 to vector<1x128xf32>
    %81 = arith.subf %80, %70 : vector<1x128xf32>
    %82 = arith.mulf %81, %79 : vector<1x128xf32>
    %83 = vector.broadcast %79 : vector<1x128xf32> to vector<8x128xf32>
    %84 = arith.mulf %63, %83 : vector<8x128xf32>
    %85 = vector.broadcast %82 : vector<1x128xf32> to vector<8x128xf32>
    %86 = arith.addf %84, %85 : vector<8x128xf32>
    %c0_32 = arith.constant 0 : index
    %c0_33 = arith.constant 0 : index
    %87 = vector.load %arg4[%c0_32, %c0_33] : memref<8x128xf32, #tpu.memory_space<vmem>>, vector<8x128xf32>
    tpu.vector_store %arg4[%c0_32, %c0_33], %86 {strides = array<i32>} : memref<8x128xf32, #tpu.memory_space<vmem>>, vector<8x128xf32>,
    return
  }
}

</mosaic_0001>

<llo_original>
// kernel: classifier_forward.1
$region0: #{classifier_forward.1}
  #allocation0 [shape = 'u32[]', space=smem, size = 0x4, offset = 0x4, fixed_abs, tag = 'smem constant byte address 0x4 - core index']
  #allocation1 [shape = 'u32[144,128]{1,0:T(1,128)}', space=vmem, size = 0x12000, scoped, tag = 'internal scratch']
  %s0 = inlined_call_operand.vmem [shape: f32[8,64], index: 0, kind: input, shape index: {}]
  %s1 = inlined_call_operand.hbm [shape: bf16[64,512], index: 1, kind: input, shape index: {}]
  %s2 = inlined_call_operand.hbm [shape: bf16[512,256], index: 2, kind: input, shape index: {}]
  %s3 = inlined_call_operand.hbm [shape: bf16[256,128], index: 3, kind: input, shape index: {}]
  %s4 = inlined_call_operand.hbm [shape: f32[8,128], index: 4, kind: output, shape index: {}]
  %s5 = sld [smem:[#allocation0]]
  $region38: #{classifier_forward.1} parent=0
    _
  %s7 = ssub.s32 1, %s5
  %s8 = scalar_select 0, %s7, %s5
  $region1: #{classifier_forward.1} parent=0
    #allocation2 [shape = 'u8[65536]{0}', space=vmem, size = 0x10000, scoped, tag = 'input window, operand 1, single buffered']
    #allocation3 [shape = 's32[1]{0}', space=sflag, size = 0x4, scoped, tag = 'scoped memory for classifier_forward.1']
    #allocation4 [shape = 's32[1]{0}', space=sflag, size = 0x4, scoped, tag = 'scoped memory for classifier_forward.1']
    #allocation5 [shape = 'u8[262144]{0}', space=vmem, size = 0x40000, scoped, tag = 'input window, operand 2, single buffered']
    #allocation6 [shape = 's32[1]{0}', space=sflag, size = 0x4, scoped, tag = 'scoped memory for classifier_forward.1']
    #allocation7 [shape = 'u8[65536]{0}', space=vmem, size = 0x10000, scoped, tag = 'input window, operand 3, single buffered']
    #allocation8 [shape = 'u8[4096]{0}', space=vmem, size = 0x1000, scoped, tag = 'output window, operand 0, single buffered']
    %9 = vsyncpa [#allocation3], 0
    %10 = vsyncpa [#allocation6], 0
    %11 = vsyncpa [#allocation4], 0
    // Predicated region
    $region2: #{classifier_forward.1} parent=1 // pred_check
      _
    $region3: #{classifier_forward.1} parent=1 // pred_check_branch
      %13 = sbr.rel (0) target = $region5
    $region4: #{classifier_forward.1} parent=1 // pred_region
      _
    $region5: #{classifier_forward.1} parent=1 // pred_fallthru
      _
    // Predicated region
    $region6: #{classifier_forward.1} parent=1 // pred_check
      _
    $region7: #{classifier_forward.1} parent=1 // pred_check_branch
      %15 = sbr.rel (0) target = $region9
    $region8: #{classifier_forward.1} parent=1 // pred_region
      %s17 = ssub.s32 2048, 2048
      %18 = vsyncadd [#allocation3], %s17
      %s19 = sshll.u32 [#allocation2], 4
      %s20 = int_to_ptr.vmem [resolvable:$true] %s19
      %25 = dma.hbm_to_vmem [thread:$0]  %s1, 2048, %s20, [#allocation3], 256, 256, 16
    $region9: #{classifier_forward.1} parent=1 // pred_fallthru
      _
    // Predicated region
    $region10: #{classifier_forward.1} parent=1 // pred_check
      _
    $region11: #{classifier_forward.1} parent=1 // pred_check_branch
      %27 = sbr.rel (0) target = $region13
    $region12: #{classifier_forward.1} parent=1 // pred_region
      %s29 = ssub.s32 8192, 8192
      %30 = vsyncadd [#allocation6], %s29
      %s31 = sshll.u32 [#allocation5], 4
      %s32 = int_to_ptr.vmem [resolvable:$true] %s31
      %37 = dma.hbm_to_vmem [thread:$0]  %s2, 8192, %s32, [#allocation6], 128, 128, 8
    $region13: #{classifier_forward.1} parent=1 // pred_fallthru
      _
    // Predicated region
    $region14: #{classifier_forward.1} parent=1 // pred_check
      _
    $region15: #{classifier_forward.1} parent=1 // pred_check_branch
      %39 = sbr.rel (0) target = $region17
    $region16: #{classifier_forward.1} parent=1 // pred_region
      %s41 = ssub.s32 2048, 2048
      %42 = vsyncadd [#allocation6], %s41
      %s43 = sshll.u32 [#allocation7], 4
      %s44 = int_to_ptr.vmem [resolvable:$true] %s43
      %49 = dma.hbm_to_vmem [thread:$0]  %s3, 2048, %s44, [#allocation6], 64, 64, 4
    $region17: #{classifier_forward.1} parent=1 // pred_fallthru
      _
    // Predicated region
    $region18: #{classifier_forward.1} parent=1 // pred_check
      _
    $region19: #{classifier_forward.1} parent=1 // pred_check_branch
      %51 = sbr.rel (0) target = $region21
    $region20: #{classifier_forward.1} parent=1 // pred_region
      %52 = dma.done [#allocation3], 2048
    $region21: #{classifier_forward.1} parent=1 // pred_fallthru
      _
    // Predicated region
    $region22: #{classifier_forward.1} parent=1 // pred_check
      _
    $region23: #{classifier_forward.1} parent=1 // pred_check_branch
      %54 = sbr.rel (0) target = $region25
    $region24: #{classifier_forward.1} parent=1 // pred_region
      %55 = dma.done [#allocation6], 8192
    $region25: #{classifier_forward.1} parent=1 // pred_fallthru
      _
    // Predicated region
    $region26: #{classifier_forward.1} parent=1 // pred_check
      _
    $region27: #{classifier_forward.1} parent=1 // pred_check_branch
      %57 = sbr.rel (0) target = $region29
    $region28: #{classifier_forward.1} parent=1 // pred_region
      %58 = dma.done [#allocation6], 2048
    $region29: #{classifier_forward.1} parent=1 // pred_fallthru
      _
    %v60 = vld [vmem:[%s0] sm:$0xff]
    %v61 = vpack.c.bf16 %v60, %v60
    %v62 = vld [vmem:[#allocation2] sm:$0xff]
    %v63 = vld [vmem:[#allocation2 + $0x8] sm:$0xff]
    %v64 = vld [vmem:[#allocation2 + $0x10] sm:$0xff]
    %v65 = vld [vmem:[#allocation2 + $0x18] sm:$0xff]
    %v66 = vld [vmem:[#allocation2 + $0x20] sm:$0xff]
    %v67 = vld [vmem:[#allocation2 + $0x28] sm:$0xff]
    %v68 = vld [vmem:[#allocation2 + $0x30] sm:$0xff]
    %v69 = vld [vmem:[#allocation2 + $0x38] sm:$0xff]
    %v70 = vld [vmem:[#allocation2 + $0x40] sm:$0xff]
    %v71 = vld [vmem:[#allocation2 + $0x48] sm:$0xff]
    %v72 = vld [vmem:[#allocation2 + $0x50] sm:$0xff]
    %v73 = vld [vmem:[#allocation2 + $0x58] sm:$0xff]
    %v74 = vld [vmem:[#allocation2 + $0x60] sm:$0xff]
    %v75 = vld [vmem:[#allocation2 + $0x68] sm:$0xff]
    %v76 = vld [vmem:[#allocation2 + $0x70] sm:$0xff]
    %v77 = vld [vmem:[#allocation2 + $0x78] sm:$0xff]
    %v94 = vunpack.c.l.b16 %v62
    %v95 = vunpack.c.h.b16 %v62
    %v96 = vunpack.c.l.b16 %v63
    %v97 = vunpack.c.h.b16 %v63
    %v98 = vunpack.c.l.b16 %v64
    %v99 = vunpack.c.h.b16 %v64
    %v100 = vunpack.c.l.b16 %v65
    %v101 = vunpack.c.h.b16 %v65
    %v102 = vunpack.c.l.b16 %v66
    %v103 = vunpack.c.h.b16 %v66
    %v104 = vunpack.c.l.b16 %v67
    %v105 = vunpack.c.h.b16 %v67
    %v106 = vunpack.c.l.b16 %v68
    %v107 = vunpack.c.h.b16 %v68
    %v108 = vunpack.c.l.b16 %v69
    %v109 = vunpack.c.h.b16 %v69
    %v110 = vunpack.c.l.b16 %v70
    %v111 = vunpack.c.h.b16 %v70
    %v112 = vunpack.c.l.b16 %v71
    %v113 = vunpack.c.h.b16 %v71
    %v114 = vunpack.c.l.b16 %v72
    %v115 = vunpack.c.h.b16 %v72
    %v116 = vunpack.c.l.b16 %v73
    %v117 = vunpack.c.h.b16 %v73
    %v118 = vunpack.c.l.b16 %v74
    %v119 = vunpack.c.h.b16 %v74
    %v120 = vunpack.c.l.b16 %v75
    %v121 = vunpack.c.h.b16 %v75
    %v122 = vunpack.c.l.b16 %v76
    %v123 = vunpack.c.h.b16 %v76
    %v124 = vunpack.c.l.b16 %v77
    %v125 = vunpack.c.h.b16 %v77
    %v126 = vpack.c.b16 %v98, %v94
    %v127 = vpack.c.b16 %v99, %v95
    %v128 = vpack.c.b16 %v100, %v96
    %v129 = vpack.c.b16 %v101, %v97
    %v130 = vpack.c.b16 %v106, %v102
    %v131 = vpack.c.b16 %v107, %v103
    %v132 = vpack.c.b16 %v108, %v104
    %v133 = vpack.c.b16 %v109, %v105
    %v134 = vpack.c.b16 %v114, %v110
    %v135 = vpack.c.b16 %v115, %v111
    %v136 = vpack.c.b16 %v116, %v112
    %v137 = vpack.c.b16 %v117, %v113
    %v138 = vpack.c.b16 %v122, %v118
    %v139 = vpack.c.b16 %v123, %v119
    %v140 = vpack.c.b16 %v124, %v120
    %v141 = vpack.c.b16 %v125, %v121
    %vm158 = vcmask 523264
    %v160 = vsel %vm158, %v61, 0
    %162 = vmatprep.subr.bf16.mxu0 %v127
    %163 = vmatpush1.bf16.msra.mxu0 %v126
    %164 = vmatprep.subr.bf16.mxu0 %v131
    %165 = vmatpush1.bf16.msra.mxu0 %v130
    %166 = vmatprep.subr.bf16.mxu0 %v135
    %167 = vmatpush1.bf16.msra.mxu0 %v134
    %168 = vmatprep.subr.bf16.mxu0 %v139
    %169 = vmatpush1.bf16.msra.mxu0 %v138
    %170 = vmatprep.subr.bf16.mxu0 0
    %171 = vmatpush1.bf16.msra.mxu0 0
    %172 = vmatprep.subr.bf16.mxu0 0
    %173 = vmatpush1.bf16.msra.mxu0 0
    %174 = vmatprep.subr.bf16.mxu0 0
    %175 = vmatpush1.bf16.msra.mxu0 0
    %176 = vmatprep.subr.bf16.mxu0 0
    %177 = vmatpush1.bf16.msra.mxu0 0
    %178 = vmatprep.subr.bf16.mxu0 0
    %179 = vmatpush1.bf16.msra.mxu0 0
    %180 = vmatprep.subr.bf16.mxu0 0
    %181 = vmatpush1.bf16.msra.mxu0 0
    %182 = vmatprep.subr.bf16.mxu0 0
    %183 = vmatpush1.bf16.msra.mxu0 0
    %184 = vmatprep.subr.bf16.mxu0 0
    %185 = vmatpush1.bf16.msra.mxu0 0
    %186 = vmatprep.subr.bf16.mxu0 0
    %187 = vmatpush1.bf16.msra.mxu0 0
    %188 = vmatprep.subr.bf16.mxu0 0
    %189 = vmatpush1.bf16.msra.mxu0 0
    %190 = vmatprep.subr.bf16.mxu0 0
    %191 = vmatpush1.bf16.msra.mxu0 0
    %192 = vmatprep.subr.bf16.mxu0 0
    %193 = vmatpush1.bf16.msra.mxu0 0
    %194 = vmatprep.mubr.bf16.mxu0 0
    %195 = vmatmul.mubr.bf16.gmra.mrb[0].mxu0 %v160
    %v196 = vpop.f32.mrb[0].mxu0
    %v197 = vadd.f32 0.0, %v196
    %v198 = vpop.f32.mrb[0].mxu0
    %v199 = vadd.f32 0.0, %v198
    %v200 = vpop.f32.mrb[0].mxu0
    %v201 = vpop.f32.mrb[0].mxu0
    %202 = vdwg.mxu0
    %203 = vmatprep.subr.bf16.mxu0 %v129
    %204 = vmatpush1.bf16.msra.mxu0 %v128
    %205 = vmatprep.subr.bf16.mxu0 %v133
    %206 = vmatpush1.bf16.msra.mxu0 %v132
    %207 = vmatprep.subr.bf16.mxu0 %v137
    %208 = vmatpush1.bf16.msra.mxu0 %v136
    %209 = vmatprep.subr.bf16.mxu0 %v141
    %210 = vmatpush1.bf16.msra.mxu0 %v140
    %211 = vmatprep.subr.bf16.mxu0 0
    %212 = vmatpush1.bf16.msra.mxu0 0
    %213 = vmatprep.subr.bf16.mxu0 0
    %214 = vmatpush1.bf16.msra.mxu0 0
    %215 = vmatprep.subr.bf16.mxu0 0
    %216 = vmatpush1.bf16.msra.mxu0 0
    %217 = vmatprep.subr.bf16.mxu0 0
    %218 = vmatpush1.bf16.msra.mxu0 0
    %219 = vmatprep.subr.bf16.mxu0 0
    %220 = vmatpush1.bf16.msra.mxu0 0
    %221 = vmatprep.subr.bf16.mxu0 0
    %222 = vmatpush1.bf16.msra.mxu0 0
    %223 = vmatprep.subr.bf16.mxu0 0
    %224 = vmatpush1.bf16.msra.mxu0 0
    %225 = vmatprep.subr.bf16.mxu0 0
    %226 = vmatpush1.bf16.msra.mxu0 0
    %227 = vmatprep.subr.bf16.mxu0 0
    %228 = vmatpush1.bf16.msra.mxu0 0
    %229 = vmatprep.subr.bf16.mxu0 0
    %230 = vmatpush1.bf16.msra.mxu0 0
    %231 = vmatprep.subr.bf16.mxu0 0
    %232 = vmatpush1.bf16.msra.mxu0 0
    %233 = vmatprep.subr.bf16.mxu0 0
    %234 = vmatpush1.bf16.msra.mxu0 0
    %235 = vmatprep.mubr.bf16.mxu0 0
    %236 = vmatmul.mubr.bf16.gmra.mrb[0].mxu0 %v160
    %v237 = vpop.f32.mrb[0].mxu0
    %v238 = vadd.f32 0.0, %v237
    %v239 = vpop.f32.mrb[0].mxu0
    %v240 = vadd.f32 0.0, %v239
    %v241 = vpop.f32.mrb[0].mxu0
    %v242 = vpop.f32.mrb[0].mxu0
    %243 = vdwg.mxu0
    %v244 = vrot.slane %v197, 4
    %v245 = vadd.f32 %v197, %v244
    %v246 = vrot.slane %v245, 2
    %v247 = vadd.f32 %v245, %v246
    %v248 = vrot.slane %v247, 1
    %v249 = vadd.f32 %v247, %v248
    %v250 = vrot.slane %v199, 4
    %v251 = vadd.f32 %v199, %v250
    %v252 = vrot.slane %v251, 2
    %v253 = vadd.f32 %v251, %v252
    %v254 = vrot.slane %v253, 1
    %v255 = vadd.f32 %v253, %v254
    %v256 = vrot.slane %v238, 4
    %v257 = vadd.f32 %v238, %v256
    %v258 = vrot.slane %v257, 2
    %v259 = vadd.f32 %v257, %v258
    %v260 = vrot.slane %v259, 1
    %v261 = vadd.f32 %v259, %v260
    %v262 = vrot.slane %v240, 4
    %v263 = vadd.f32 %v240, %v262
    %v264 = vrot.slane %v263, 2
    %v265 = vadd.f32 %v263, %v264
    %v266 = vrot.slane %v265, 1
    %v267 = vadd.f32 %v265, %v266
    %v268 = vmul.f32 %v197, %v197
    %v269 = vmul.f32 %v199, %v199
    %v270 = vmul.f32 %v238, %v238
    %v271 = vmul.f32 %v240, %v240
    %v272 = vrot.slane %v268, 4
    %v273 = vadd.f32 %v268, %v272
    %v274 = vrot.slane %v273, 2
    %v275 = vadd.f32 %v273, %v274
    %v276 = vrot.slane %v275, 1
    %v277 = vadd.f32 %v275, %v276
    %v278 = vrot.slane %v269, 4
    %v279 = vadd.f32 %v269, %v278
    %v280 = vrot.slane %v279, 2
    %v281 = vadd.f32 %v279, %v280
    %v282 = vrot.slane %v281, 1
    %v283 = vadd.f32 %v281, %v282
    %v284 = vrot.slane %v270, 4
    %v285 = vadd.f32 %v270, %v284
    %v286 = vrot.slane %v285, 2
    %v287 = vadd.f32 %v285, %v286
    %v288 = vrot.slane %v287, 1
    %v289 = vadd.f32 %v287, %v288
    %v290 = vrot.slane %v271, 4
    %v291 = vadd.f32 %v271, %v290
    %v292 = vrot.slane %v291, 2
    %v293 = vadd.f32 %v291, %v292
    %v294 = vrot.slane %v293, 1
    %v295 = vadd.f32 %v293, %v294
    %v296 = vmul.f32 %v249, 0.125
    %v297 = vmul.f32 %v255, 0.125
    %v298 = vmul.f32 %v261, 0.125
    %v299 = vmul.f32 %v267, 0.125
    %v300 = vmul.f32 %v277, 0.125
    %v301 = vmul.f32 %v283, 0.125
    %v302 = vmul.f32 %v289, 0.125
    %v303 = vmul.f32 %v295, 0.125
    %v304 = vmul.f32 %v296, %v296
    %v305 = vmul.f32 %v297, %v297
    %v306 = vmul.f32 %v298, %v298
    %v307 = vmul.f32 %v299, %v299
    %v308 = vsub.f32 %v300, %v304
    %v309 = vsub.f32 %v301, %v305
    %v310 = vsub.f32 %v302, %v306
    %v311 = vsub.f32 %v303, %v307
    %v312 = vmax.f32 %v308, 0.0
    %v313 = vmax.f32 %v309, 0.0
    %v314 = vmax.f32 %v310, 0.0
    %v315 = vmax.f32 %v311, 0.0
    %v316 = vadd.f32 %v312, 1e-05
    %v317 = vadd.f32 %v313, 1e-05
    %v318 = vadd.f32 %v314, 1e-05
    %v319 = vadd.f32 %v315, 1e-05
    %v320 = vrsqrt.pop %v316
    %v321 = vrsqrt.pop %v317
    %v322 = vrsqrt.pop %v318
    %v323 = vrsqrt.pop %v319
    %v324 = vsub.f32 0.0, %v296
    %v325 = vsub.f32 0.0, %v297
    %v326 = vsub.f32 0.0, %v298
    %v327 = vsub.f32 0.0, %v299
    %v328 = vmul.f32 %v324, %v320
    %v329 = vmul.f32 %v325, %v321
    %v330 = vmul.f32 %v326, %v322
    %v331 = vmul.f32 %v327, %v323
    %v332 = vpack.c.bf16 %v197, %v197
    %v333 = vpack.c.bf16 %v199, %v199
    %v334 = vpack.c.bf16 %v238, %v238
    %v335 = vpack.c.bf16 %v240, %v240
    %v336 = vpack.c.bf16 %v320, %v320
    %v337 = vpack.c.bf16 %v321, %v321
    %v338 = vpack.c.bf16 %v322, %v322
    %v339 = vpack.c.bf16 %v323, %v323
    %v340 = vmul.bf16 %v332, %v336
    %v341 = vmul.bf16 %v333, %v337
    %v342 = vmul.bf16 %v334, %v338
    %v343 = vmul.bf16 %v335, %v339
    %v344 = vpack.c.bf16 %v328, %v328
    %v345 = vpack.c.bf16 %v329, %v329
    %v346 = vpack.c.bf16 %v330, %v330
    %v347 = vpack.c.bf16 %v331, %v331
    %v348 = vadd.bf16 %v340, %v344
    %v349 = vadd.bf16 %v341, %v345
    %v350 = vadd.bf16 %v342, %v346
    %v351 = vadd.bf16 %v343, %v347
    %v352 = vmax.bf16 %v348, 0
    %v353 = vmax.bf16 %v349, 0
    %v354 = vmax.bf16 %v350, 0
    %v355 = vmax.bf16 %v351, 0
    %v356 = vld [vmem:[#allocation5] sm:$0xff]
    %v357 = vld [vmem:[#allocation5 + $0x8] sm:$0xff]
    %v358 = vld [vmem:[#allocation5 + $0x10] sm:$0xff]
    %v359 = vld [vmem:[#allocation5 + $0x18] sm:$0xff]
    %v360 = vld [vmem:[#allocation5 + $0x20] sm:$0xff]
    %v361 = vld [vmem:[#allocation5 + $0x28] sm:$0xff]
    %v362 = vld [vmem:[#allocation5 + $0x30] sm:$0xff]
    %v363 = vld [vmem:[#allocation5 + $0x38] sm:$0xff]
    %v364 = vld [vmem:[#allocation5 + $0x40] sm:$0xff]
    %v365 = vld [vmem:[#allocation5 + $0x48] sm:$0xff]
    %v366 = vld [vmem:[#allocation5 + $0x50] sm:$0xff]
    %v367 = vld [vmem:[#allocation5 + $0x58] sm:$0xff]
    %v368 = vld [vmem:[#allocation5 + $0x60] sm:$0xff]
    %v369 = vld [vmem:[#allocation5 + $0x68] sm:$0xff]
    %v370 = vld [vmem:[#allocation5 + $0x70] sm:$0xff]
    %v371 = vld [vmem:[#allocation5 + $0x78] sm:$0xff]
    %v372 = vld [vmem:[#allocation5 + $0x80] sm:$0xff]
    %v373 = vld [vmem:[#allocation5 + $0x88] sm:$0xff]
    %v374 = vld [vmem:[#allocation5 + $0x90] sm:$0xff]
    %v375 = vld [vmem:[#allocation5 + $0x98] sm:$0xff]
    %v376 = vld [vmem:[#allocation5 + $0xa0] sm:$0xff]
    %v377 = vld [vmem:[#allocation5 + $0xa8] sm:$0xff]
    %v378 = vld [vmem:[#allocation5 + $0xb0] sm:$0xff]
    %v379 = vld [vmem:[#allocation5 + $0xb8] sm:$0xff]
    %v380 = vld [vmem:[#allocation5 + $0xc0] sm:$0xff]
    %v381 = vld [vmem:[#allocation5 + $0xc8] sm:$0xff]
    %v382 = vld [vmem:[#allocation5 + $0xd0] sm:$0xff]
    %v383 = vld [vmem:[#allocation5 + $0xd8] sm:$0xff]
    %v384 = vld [vmem:[#allocation5 + $0xe0] sm:$0xff]
    %v385 = vld [vmem:[#allocation5 + $0xe8] sm:$0xff]
    %v386 = vld [vmem:[#allocation5 + $0xf0] sm:$0xff]
    %v387 = vld [vmem:[#allocation5 + $0xf8] sm:$0xff]
    %v388 = vld [vmem:[#allocation5 + $0x100] sm:$0xff]
    %v389 = vld [vmem:[#allocation5 + $0x108] sm:$0xff]
    %v390 = vld [vmem:[#allocation5 + $0x110] sm:$0xff]
    %v391 = vld [vmem:[#allocation5 + $0x118] sm:$0xff]
    %v392 = vld [vmem:[#allocation5 + $0x120] sm:$0xff]
    %v393 = vld [vmem:[#allocation5 + $0x128] sm:$0xff]
    %v394 = vld [vmem:[#allocation5 + $0x130] sm:$0xff]
    %v395 = vld [vmem:[#allocation5 + $0x138] sm:$0xff]
    %v396 = vld [vmem:[#allocation5 + $0x140] sm:$0xff]
    %v397 = vld [vmem:[#allocation5 + $0x148] sm:$0xff]
    %v398 = vld [vmem:[#allocation5 + $0x150] sm:$0xff]
    %v399 = vld [vmem:[#allocation5 + $0x158] sm:$0xff]
    %v400 = vld [vmem:[#allocation5 + $0x160] sm:$0xff]
    %v401 = vld [vmem:[#allocation5 + $0x168] sm:$0xff]
    %v402 = vld [vmem:[#allocation5 + $0x170] sm:$0xff]
    %v403 = vld [vmem:[#allocation5 + $0x178] sm:$0xff]
    %v404 = vld [vmem:[#allocation5 + $0x180] sm:$0xff]
    %v405 = vld [vmem:[#allocation5 + $0x188] sm:$0xff]
    %v406 = vld [vmem:[#allocation5 + $0x190] sm:$0xff]
    %v407 = vld [vmem:[#allocation5 + $0x198] sm:$0xff]
    %v408 = vld [vmem:[#allocation5 + $0x1a0] sm:$0xff]
    %v409 = vld [vmem:[#allocation5 + $0x1a8] sm:$0xff]
    %v410 = vld [vmem:[#allocation5 + $0x1b0] sm:$0xff]
    %v411 = vld [vmem:[#allocation5 + $0x1b8] sm:$0xff]
    %v412 = vld [vmem:[#allocation5 + $0x1c0] sm:$0xff]
    %v413 = vld [vmem:[#allocation5 + $0x1c8] sm:$0xff]
    %v414 = vld [vmem:[#allocation5 + $0x1d0] sm:$0xff]
    %v415 = vld [vmem:[#allocation5 + $0x1d8] sm:$0xff]
    %v416 = vld [vmem:[#allocation5 + $0x1e0] sm:$0xff]
    %v417 = vld [vmem:[#allocation5 + $0x1e8] sm:$0xff]
    %v418 = vld [vmem:[#allocation5 + $0x1f0] sm:$0xff]
    %v419 = vld [vmem:[#allocation5 + $0x1f8] sm:$0xff]
    %v484 = vunpack.c.l.b16 %v356
    %v485 = vunpack.c.h.b16 %v356
    %v486 = vunpack.c.l.b16 %v357
    %v487 = vunpack.c.h.b16 %v357
    %v488 = vunpack.c.l.b16 %v358
    %v489 = vunpack.c.h.b16 %v358
    %v490 = vunpack.c.l.b16 %v359
    %v491 = vunpack.c.h.b16 %v359
    %v492 = vunpack.c.l.b16 %v360
    %v493 = vunpack.c.h.b16 %v360
    %v494 = vunpack.c.l.b16 %v361
    %v495 = vunpack.c.h.b16 %v361
    %v496 = vunpack.c.l.b16 %v362
    %v497 = vunpack.c.h.b16 %v362
    %v498 = vunpack.c.l.b16 %v363
    %v499 = vunpack.c.h.b16 %v363
    %v500 = vunpack.c.l.b16 %v364
    %v501 = vunpack.c.h.b16 %v364
    %v502 = vunpack.c.l.b16 %v365
    %v503 = vunpack.c.h.b16 %v365
    %v504 = vunpack.c.l.b16 %v366
    %v505 = vunpack.c.h.b16 %v366
    %v506 = vunpack.c.l.b16 %v367
    %v507 = vunpack.c.h.b16 %v367
    %v508 = vunpack.c.l.b16 %v368
    %v509 = vunpack.c.h.b16 %v368
    %v510 = vunpack.c.l.b16 %v369
    %v511 = vunpack.c.h.b16 %v369
    %v512 = vunpack.c.l.b16 %v370
    %v513 = vunpack.c.h.b16 %v370
    %v514 = vunpack.c.l.b16 %v371
    %v515 = vunpack.c.h.b16 %v371
    %v516 = vunpack.c.l.b16 %v372
    %v517 = vunpack.c.h.b16 %v372
    %v518 = vunpack.c.l.b16 %v373
    %v519 = vunpack.c.h.b16 %v373
    %v520 = vunpack.c.l.b16 %v374
    %v521 = vunpack.c.h.b16 %v374
    %v522 = vunpack.c.l.b16 %v375
    %v523 = vunpack.c.h.b16 %v375
    %v524 = vunpack.c.l.b16 %v376
    %v525 = vunpack.c.h.b16 %v376
    %v526 = vunpack.c.l.b16 %v377
    %v527 = vunpack.c.h.b16 %v377
    %v528 = vunpack.c.l.b16 %v378
    %v529 = vunpack.c.h.b16 %v378
    %v530 = vunpack.c.l.b16 %v379
    %v531 = vunpack.c.h.b16 %v379
    %v532 = vunpack.c.l.b16 %v380
    %v533 = vunpack.c.h.b16 %v380
    %v534 = vunpack.c.l.b16 %v381
    %v535 = vunpack.c.h.b16 %v381
    %v536 = vunpack.c.l.b16 %v382
    %v537 = vunpack.c.h.b16 %v382
    %v538 = vunpack.c.l.b16 %v383
    %v539 = vunpack.c.h.b16 %v383
    %v540 = vunpack.c.l.b16 %v384
    %v541 = vunpack.c.h.b16 %v384
    %v542 = vunpack.c.l.b16 %v385
    %v543 = vunpack.c.h.b16 %v385
    %v544 = vunpack.c.l.b16 %v386
    %v545 = vunpack.c.h.b16 %v386
    %v546 = vunpack.c.l.b16 %v387
    %v547 = vunpack.c.h.b16 %v387
    %v548 = vunpack.c.l.b16 %v388
    %v549 = vunpack.c.h.b16 %v388
    %v550 = vunpack.c.l.b16 %v389
    %v551 = vunpack.c.h.b16 %v389
    %v552 = vunpack.c.l.b16 %v390
    %v553 = vunpack.c.h.b16 %v390
    %v554 = vunpack.c.l.b16 %v391
    %v555 = vunpack.c.h.b16 %v391
    %v556 = vunpack.c.l.b16 %v392
    %v557 = vunpack.c.h.b16 %v392
    %v558 = vunpack.c.l.b16 %v393
    %v559 = vunpack.c.h.b16 %v393
    %v560 = vunpack.c.l.b16 %v394
    %v561 = vunpack.c.h.b16 %v394
    %v562 = vunpack.c.l.b16 %v395
    %v563 = vunpack.c.h.b16 %v395
    %v564 = vunpack.c.l.b16 %v396
    %v565 = vunpack.c.h.b16 %v396
    %v566 = vunpack.c.l.b16 %v397
    %v567 = vunpack.c.h.b16 %v397
    %v568 = vunpack.c.l.b16 %v398
    %v569 = vunpack.c.h.b16 %v398
    %v570 = vunpack.c.l.b16 %v399
    %v571 = vunpack.c.h.b16 %v399
    %v572 = vunpack.c.l.b16 %v400
    %v573 = vunpack.c.h.b16 %v400
    %v574 = vunpack.c.l.b16 %v401
    %v575 = vunpack.c.h.b16 %v401
    %v576 = vunpack.c.l.b16 %v402
    %v577 = vunpack.c.h.b16 %v402
    %v578 = vunpack.c.l.b16 %v403
    %v579 = vunpack.c.h.b16 %v403
    %v580 = vunpack.c.l.b16 %v404
    %v581 = vunpack.c.h.b16 %v404
    %v582 = vunpack.c.l.b16 %v405
    %v583 = vunpack.c.h.b16 %v405
    %v584 = vunpack.c.l.b16 %v406
    %v585 = vunpack.c.h.b16 %v406
    %v586 = vunpack.c.l.b16 %v407
    %v587 = vunpack.c.h.b16 %v407
    %v588 = vunpack.c.l.b16 %v408
    %v589 = vunpack.c.h.b16 %v408
    %v590 = vunpack.c.l.b16 %v409
    %v591 = vunpack.c.h.b16 %v409
    %v592 = vunpack.c.l.b16 %v410
    %v593 = vunpack.c.h.b16 %v410
    %v594 = vunpack.c.l.b16 %v411
    %v595 = vunpack.c.h.b16 %v411
    %v596 = vunpack.c.l.b16 %v412
    %v597 = vunpack.c.h.b16 %v412
    %v598 = vunpack.c.l.b16 %v413
    %v599 = vunpack.c.h.b16 %v413
    %v600 = vunpack.c.l.b16 %v414
    %v601 = vunpack.c.h.b16 %v414
    %v602 = vunpack.c.l.b16 %v415
    %v603 = vunpack.c.h.b16 %v415
    %v604 = vunpack.c.l.b16 %v416
    %v605 = vunpack.c.h.b16 %v416
    %v606 = vunpack.c.l.b16 %v417
    %v607 = vunpack.c.h.b16 %v417
    %v608 = vunpack.c.l.b16 %v418
    %v609 = vunpack.c.h.b16 %v418
    %v610 = vunpack.c.l.b16 %v419
    %v611 = vunpack.c.h.b16 %v419
    %v612 = vpack.c.b16 %v486, %v484
    %v613 = vpack.c.b16 %v487, %v485
    %v614 = vpack.c.b16 %v490, %v488
    %v615 = vpack.c.b16 %v491, %v489
    %v616 = vpack.c.b16 %v494, %v492
    %v617 = vpack.c.b16 %v495, %v493
    %v618 = vpack.c.b16 %v498, %v496
    %v619 = vpack.c.b16 %v499, %v497
    %v620 = vpack.c.b16 %v502, %v500
    %v621 = vpack.c.b16 %v503, %v501
    %v622 = vpack.c.b16 %v506, %v504
    %v623 = vpack.c.b16 %v507, %v505
    %v624 = vpack.c.b16 %v510, %v508
    %v625 = vpack.c.b16 %v511, %v509
    %v626 = vpack.c.b16 %v514, %v512
    %v627 = vpack.c.b16 %v515, %v513
    %v628 = vpack.c.b16 %v518, %v516
    %v629 = vpack.c.b16 %v519, %v517
    %v630 = vpack.c.b16 %v522, %v520
    %v631 = vpack.c.b16 %v523, %v521
    %v632 = vpack.c.b16 %v526, %v524
    %v633 = vpack.c.b16 %v527, %v525
    %v634 = vpack.c.b16 %v530, %v528
    %v635 = vpack.c.b16 %v531, %v529
    %v636 = vpack.c.b16 %v534, %v532
    %v637 = vpack.c.b16 %v535, %v533
    %v638 = vpack.c.b16 %v538, %v536
    %v639 = vpack.c.b16 %v539, %v537
    %v640 = vpack.c.b16 %v542, %v540
    %v641 = vpack.c.b16 %v543, %v541
    %v642 = vpack.c.b16 %v546, %v544
    %v643 = vpack.c.b16 %v547, %v545
    %v644 = vpack.c.b16 %v550, %v548
    %v645 = vpack.c.b16 %v551, %v549
    %v646 = vpack.c.b16 %v554, %v552
    %v647 = vpack.c.b16 %v555, %v553
    %v648 = vpack.c.b16 %v558, %v556
    %v649 = vpack.c.b16 %v559, %v557
    %v650 = vpack.c.b16 %v562, %v560
    %v651 = vpack.c.b16 %v563, %v561
    %v652 = vpack.c.b16 %v566, %v564
    %v653 = vpack.c.b16 %v567, %v565
    %v654 = vpack.c.b16 %v570, %v568
    %v655 = vpack.c.b16 %v571, %v569
    %v656 = vpack.c.b16 %v574, %v572
    %v657 = vpack.c.b16 %v575, %v573
    %v658 = vpack.c.b16 %v578, %v576
    %v659 = vpack.c.b16 %v579, %v577
    %v660 = vpack.c.b16 %v582, %v580
    %v661 = vpack.c.b16 %v583, %v581
    %v662 = vpack.c.b16 %v586, %v584
    %v663 = vpack.c.b16 %v587, %v585
    %v664 = vpack.c.b16 %v590, %v588
    %v665 = vpack.c.b16 %v591, %v589
    %v666 = vpack.c.b16 %v594, %v592
    %v667 = vpack.c.b16 %v595, %v593
    %v668 = vpack.c.b16 %v598, %v596
    %v669 = vpack.c.b16 %v599, %v597
    %v670 = vpack.c.b16 %v602, %v600
    %v671 = vpack.c.b16 %v603, %v601
    %v672 = vpack.c.b16 %v606, %v604
    %v673 = vpack.c.b16 %v607, %v605
    %v674 = vpack.c.b16 %v610, %v608
    %v675 = vpack.c.b16 %v611, %v609
    %740 = vmatprep.subr.bf16.mxu0 %v613
    %741 = vmatpush1.bf16.msra.mxu0 %v612
    %742 = vmatprep.subr.bf16.mxu0 %v615
    %743 = vmatpush1.bf16.msra.mxu0 %v614
    %744 = vmatprep.subr.bf16.mxu0 %v617
    %745 = vmatpush1.bf16.msra.mxu0 %v616
    %746 = vmatprep.subr.bf16.mxu0 %v619
    %747 = vmatpush1.bf16.msra.mxu0 %v618
    %748 = vmatprep.subr.bf16.mxu0 %v621
    %749 = vmatpush1.bf16.msra.mxu0 %v620
    %750 = vmatprep.subr.bf16.mxu0 %v623
    %751 = vmatpush1.bf16.msra.mxu0 %v622
    %752 = vmatprep.subr.bf16.mxu0 %v625
    %753 = vmatpush1.bf16.msra.mxu0 %v624
    %754 = vmatprep.subr.bf16.mxu0 %v627
    %755 = vmatpush1.bf16.msra.mxu0 %v626
    %756 = vmatprep.subr.bf16.mxu0 %v629
    %757 = vmatpush1.bf16.msra.mxu0 %v628
    %758 = vmatprep.subr.bf16.mxu0 %v631
    %759 = vmatpush1.bf16.msra.mxu0 %v630
    %760 = vmatprep.subr.bf16.mxu0 %v633
    %761 = vmatpush1.bf16.msra.mxu0 %v632
    %762 = vmatprep.subr.bf16.mxu0 %v635
    %763 = vmatpush1.bf16.msra.mxu0 %v634
    %764 = vmatprep.subr.bf16.mxu0 %v637
    %765 = vmatpush1.bf16.msra.mxu0 %v636
    %766 = vmatprep.subr.bf16.mxu0 %v639
    %767 = vmatpush1.bf16.msra.mxu0 %v638
    %768 = vmatprep.subr.bf16.mxu0 %v641
    %769 = vmatpush1.bf16.msra.mxu0 %v640
    %770 = vmatprep.subr.bf16.mxu0 %v643
    %771 = vmatpush1.bf16.msra.mxu0 %v642
    %772 = vmatprep.mubr.bf16.mxu0 %v353
    %773 = vmatmul.mubr.bf16.gmra.mrb[0].mxu0 %v352
    %v774 = vpop.f32.mrb[0].mxu0
    %v775 = vadd.f32 0.0, %v774
    %v776 = vpop.f32.mrb[0].mxu0
    %v777 = vadd.f32 0.0, %v776
    %v778 = vpop.f32.mrb[0].mxu0
    %v779 = vpop.f32.mrb[0].mxu0
    %780 = vdwg.mxu0
    %781 = vmatprep.subr.bf16.mxu0 %v645
    %782 = vmatpush1.bf16.msra.mxu0 %v644
    %783 = vmatprep.subr.bf16.mxu0 %v647
    %784 = vmatpush1.bf16.msra.mxu0 %v646
    %785 = vmatprep.subr.bf16.mxu0 %v649
    %786 = vmatpush1.bf16.msra.mxu0 %v648
    %787 = vmatprep.subr.bf16.mxu0 %v651
    %788 = vmatpush1.bf16.msra.mxu0 %v650
    %789 = vmatprep.subr.bf16.mxu0 %v653
    %790 = vmatpush1.bf16.msra.mxu0 %v652
    %791 = vmatprep.subr.bf16.mxu0 %v655
    %792 = vmatpush1.bf16.msra.mxu0 %v654
    %793 = vmatprep.subr.bf16.mxu0 %v657
    %794 = vmatpush1.bf16.msra.mxu0 %v656
    %795 = vmatprep.subr.bf16.mxu0 %v659
    %796 = vmatpush1.bf16.msra.mxu0 %v658
    %797 = vmatprep.subr.bf16.mxu0 %v661
    %798 = vmatpush1.bf16.msra.mxu0 %v660
    %799 = vmatprep.subr.bf16.mxu0 %v663
    %800 = vmatpush1.bf16.msra.mxu0 %v662
    %801 = vmatprep.subr.bf16.mxu0 %v665
    %802 = vmatpush1.bf16.msra.mxu0 %v664
    %803 = vmatprep.subr.bf16.mxu0 %v667
    %804 = vmatpush1.bf16.msra.mxu0 %v666
    %805 = vmatprep.subr.bf16.mxu0 %v669
    %806 = vmatpush1.bf16.msra.mxu0 %v668
    %807 = vmatprep.subr.bf16.mxu0 %v671
    %808 = vmatpush1.bf16.msra.mxu0 %v670
    %809 = vmatprep.subr.bf16.mxu0 %v673
    %810 = vmatpush1.bf16.msra.mxu0 %v672
    %811 = vmatprep.subr.bf16.mxu0 %v675
    %812 = vmatpush1.bf16.msra.mxu0 %v674
    %813 = vmatprep.mubr.bf16.mxu0 %v355
    %814 = vmatmul.mubr.bf16.gmra.mrb[0].mxu0 %v354
    %v815 = vpop.f32.mrb[0].mxu0
    %v816 = vadd.f32 %v775, %v815
    %v817 = vpop.f32.mrb[0].mxu0
    %v818 = vadd.f32 %v777, %v817
    %v819 = vpop.f32.mrb[0].mxu0
    %v820 = vpop.f32.mrb[0].mxu0
    %821 = vdwg.mxu0
    %v822 = vrot.slane %v816, 4
    %v823 = vadd.f32 %v816, %v822
    %v824 = vrot.slane %v823, 2
    %v825 = vadd.f32 %v823, %v824
    %v826 = vrot.slane %v825, 1
    %v827 = vadd.f32 %v825, %v826
    %v828 = vrot.slane %v818, 4
    %v829 = vadd.f32 %v818, %v828
    %v830 = vrot.slane %v829, 2
    %v831 = vadd.f32 %v829, %v830
    %v832 = vrot.slane %v831, 1
    %v833 = vadd.f32 %v831, %v832
    %v834 = vmul.f32 %v816, %v816
    %v835 = vmul.f32 %v818, %v818
    %v836 = vrot.slane %v834, 4
    %v837 = vadd.f32 %v834, %v836
    %v838 = vrot.slane %v837, 2
    %v839 = vadd.f32 %v837, %v838
    %v840 = vrot.slane %v839, 1
    %v841 = vadd.f32 %v839, %v840
    %v842 = vrot.slane %v835, 4
    %v843 = vadd.f32 %v835, %v842
    %v844 = vrot.slane %v843, 2
    %v845 = vadd.f32 %v843, %v844
    %v846 = vrot.slane %v845, 1
    %v847 = vadd.f32 %v845, %v846
    %v848 = vmul.f32 %v827, 0.125
    %v849 = vmul.f32 %v833, 0.125
    %v850 = vmul.f32 %v841, 0.125
    %v851 = vmul.f32 %v847, 0.125
    %v852 = vmul.f32 %v848, %v848
    %v853 = vmul.f32 %v849, %v849
    %v854 = vsub.f32 %v850, %v852
    %v855 = vsub.f32 %v851, %v853
    %v856 = vmax.f32 %v854, 0.0
    %v857 = vmax.f32 %v855, 0.0
    %v858 = vadd.f32 %v856, 1e-05
    %v859 = vadd.f32 %v857, 1e-05
    %v860 = vrsqrt.pop %v858
    %v861 = vrsqrt.pop %v859
    %v862 = vsub.f32 0.0, %v848
    %v863 = vsub.f32 0.0, %v849
    %v864 = vmul.f32 %v862, %v860
    %v865 = vmul.f32 %v863, %v861
    %v866 = vpack.c.bf16 %v816, %v816
    %v867 = vpack.c.bf16 %v818, %v818
    %v868 = vpack.c.bf16 %v860, %v860
    %v869 = vpack.c.bf16 %v861, %v861
    %v870 = vmul.bf16 %v866, %v868
    %v871 = vmul.bf16 %v867, %v869
    %v872 = vpack.c.bf16 %v864, %v864
    %v873 = vpack.c.bf16 %v865, %v865
    %v874 = vadd.bf16 %v870, %v872
    %v875 = vadd.bf16 %v871, %v873
    %v876 = vmax.bf16 %v874, 0
    %v877 = vmax.bf16 %v875, 0
    %v878 = vld [vmem:[#allocation7] sm:$0xf]
    %v879 = vld [vmem:[#allocation7 + $0x4] sm:$0xf]
    %v880 = vld [vmem:[#allocation7 + $0x8] sm:$0xf]
    %v881 = vld [vmem:[#allocation7 + $0xc] sm:$0xf]
    %v882 = vld [vmem:[#allocation7 + $0x10] sm:$0xf]
    %v883 = vld [vmem:[#allocation7 + $0x14] sm:$0xf]
    %v884 = vld [vmem:[#allocation7 + $0x18] sm:$0xf]
    %v885 = vld [vmem:[#allocation7 + $0x1c] sm:$0xf]
    %v886 = vld [vmem:[#allocation7 + $0x20] sm:$0xf]
    %v887 = vld [vmem:[#allocation7 + $0x24] sm:$0xf]
    %v888 = vld [vmem:[#allocation7 + $0x28] sm:$0xf]
    %v889 = vld [vmem:[#allocation7 + $0x2c] sm:$0xf]
    %v890 = vld [vmem:[#allocation7 + $0x30] sm:$0xf]
    %v891 = vld [vmem:[#allocation7 + $0x34] sm:$0xf]
    %v892 = vld [vmem:[#allocation7 + $0x38] sm:$0xf]
    %v893 = vld [vmem:[#allocation7 + $0x3c] sm:$0xf]
    %v894 = vld [vmem:[#allocation7 + $0x40] sm:$0xf]
    %v895 = vld [vmem:[#allocation7 + $0x44] sm:$0xf]
    %v896 = vld [vmem:[#allocation7 + $0x48] sm:$0xf]
    %v897 = vld [vmem:[#allocation7 + $0x4c] sm:$0xf]
    %v898 = vld [vmem:[#allocation7 + $0x50] sm:$0xf]
    %v899 = vld [vmem:[#allocation7 + $0x54] sm:$0xf]
    %v900 = vld [vmem:[#allocation7 + $0x58] sm:$0xf]
    %v901 = vld [vmem:[#allocation7 + $0x5c] sm:$0xf]
    %v902 = vld [vmem:[#allocation7 + $0x60] sm:$0xf]
    %v903 = vld [vmem:[#allocation7 + $0x64] sm:$0xf]
    %v904 = vld [vmem:[#allocation7 + $0x68] sm:$0xf]
    %v905 = vld [vmem:[#allocation7 + $0x6c] sm:$0xf]
    %v906 = vld [vmem:[#allocation7 + $0x70] sm:$0xf]
    %v907 = vld [vmem:[#allocation7 + $0x74] sm:$0xf]
    %v908 = vld [vmem:[#allocation7 + $0x78] sm:$0xf]
    %v909 = vld [vmem:[#allocation7 + $0x7c] sm:$0xf]
    %v942 = vunpack.c.l.b16 %v878
    %v943 = vunpack.c.l.b16 %v879
    %v944 = vunpack.c.l.b16 %v880
    %v945 = vunpack.c.l.b16 %v881
    %v946 = vunpack.c.l.b16 %v882
    %v947 = vunpack.c.l.b16 %v883
    %v948 = vunpack.c.l.b16 %v884
    %v949 = vunpack.c.l.b16 %v885
    %v950 = vunpack.c.l.b16 %v886
    %v951 = vunpack.c.l.b16 %v887
    %v952 = vunpack.c.l.b16 %v888
    %v953 = vunpack.c.l.b16 %v889
    %v954 = vunpack.c.l.b16 %v890
    %v955 = vunpack.c.l.b16 %v891
    %v956 = vunpack.c.l.b16 %v892
    %v957 = vunpack.c.l.b16 %v893
    %v958 = vunpack.c.l.b16 %v894
    %v959 = vunpack.c.l.b16 %v895
    %v960 = vunpack.c.l.b16 %v896
    %v961 = vunpack.c.l.b16 %v897
    %v962 = vunpack.c.l.b16 %v898
    %v963 = vunpack.c.l.b16 %v899
    %v964 = vunpack.c.l.b16 %v900
    %v965 = vunpack.c.l.b16 %v901
    %v966 = vunpack.c.l.b16 %v902
    %v967 = vunpack.c.l.b16 %v903
    %v968 = vunpack.c.l.b16 %v904
    %v969 = vunpack.c.l.b16 %v905
    %v970 = vunpack.c.l.b16 %v906
    %v971 = vunpack.c.l.b16 %v907
    %v972 = vunpack.c.l.b16 %v908
    %v973 = vunpack.c.l.b16 %v909
    %v974 = vpack.c.b16 %v943, %v942
    %v975 = vpack.c.b16 %v945, %v944
    %v976 = vpack.c.b16 %v947, %v946
    %v977 = vpack.c.b16 %v949, %v948
    %v978 = vpack.c.b16 %v951, %v950
    %v979 = vpack.c.b16 %v953, %v952
    %v980 = vpack.c.b16 %v955, %v954
    %v981 = vpack.c.b16 %v957, %v956
    %v982 = vpack.c.b16 %v959, %v958
    %v983 = vpack.c.b16 %v961, %v960
    %v984 = vpack.c.b16 %v963, %v962
    %v985 = vpack.c.b16 %v965, %v964
    %v986 = vpack.c.b16 %v967, %v966
    %v987 = vpack.c.b16 %v969, %v968
    %v988 = vpack.c.b16 %v971, %v970
    %v989 = vpack.c.b16 %v973, %v972
    %1006 = vmatprep.subr.bf16.mxu0 0
    %1007 = vmatpush1.bf16.msra.mxu0 %v974
    %1008 = vmatprep.subr.bf16.mxu0 0
    %1009 = vmatpush1.bf16.msra.mxu0 %v975
    %1010 = vmatprep.subr.bf16.mxu0 0
    %1011 = vmatpush1.bf16.msra.mxu0 %v976
    %1012 = vmatprep.subr.bf16.mxu0 0
    %1013 = vmatpush1.bf16.msra.mxu0 %v977
    %1014 = vmatprep.subr.bf16.mxu0 0
    %1015 = vmatpush1.bf16.msra.mxu0 %v978
    %1016 = vmatprep.subr.bf16.mxu0 0
    %1017 = vmatpush1.bf16.msra.mxu0 %v979
    %1018 = vmatprep.subr.bf16.mxu0 0
    %1019 = vmatpush1.bf16.msra.mxu0 %v980
    %1020 = vmatprep.subr.bf16.mxu0 0
    %1021 = vmatpush1.bf16.msra.mxu0 %v981
    %1022 = vmatprep.subr.bf16.mxu0 0
    %1023 = vmatpush1.bf16.msra.mxu0 %v982
    %1024 = vmatprep.subr.bf16.mxu0 0
    %1025 = vmatpush1.bf16.msra.mxu0 %v983
    %1026 = vmatprep.subr.bf16.mxu0 0
    %1027 = vmatpush1.bf16.msra.mxu0 %v984
    %1028 = vmatprep.subr.bf16.mxu0 0
    %1029 = vmatpush1.bf16.msra.mxu0 %v985
    %1030 = vmatprep.subr.bf16.mxu0 0
    %1031 = vmatpush1.bf16.msra.mxu0 %v986
    %1032 = vmatprep.subr.bf16.mxu0 0
    %1033 = vmatpush1.bf16.msra.mxu0 %v987
    %1034 = vmatprep.subr.bf16.mxu0 0
    %1035 = vmatpush1.bf16.msra.mxu0 %v988
    %1036 = vmatprep.subr.bf16.mxu0 0
    %1037 = vmatpush1.bf16.msra.mxu0 %v989
    %1038 = vmatprep.mubr.bf16.mxu0 %v877
    %1039 = vmatmul.mubr.bf16.gmra.mrb[0].mxu0 %v876
    %v1040 = vpop.f32.mrb[0].mxu0
    %v1041 = vadd.f32 0.0, %v1040
    %v1042 = vpop.f32.mrb[0].mxu0
    %v1043 = vpop.f32.mrb[0].mxu0
    %v1044 = vpop.f32.mrb[0].mxu0
    %1045 = vdwg.mxu0
    %v1046 = vrot.slane %v1041, 4
    %v1047 = vadd.f32 %v1041, %v1046
    %v1048 = vrot.slane %v1047, 2
    %v1049 = vadd.f32 %v1047, %v1048
    %v1050 = vrot.slane %v1049, 1
    %v1051 = vadd.f32 %v1049, %v1050
    %v1052 = vmul.f32 %v1041, %v1041
    %v1053 = vrot.slane %v1052, 4
    %v1054 = vadd.f32 %v1052, %v1053
    %v1055 = vrot.slane %v1054, 2
    %v1056 = vadd.f32 %v1054, %v1055
    %v1057 = vrot.slane %v1056, 1
    %v1058 = vadd.f32 %v1056, %v1057
    %v1059 = vmul.f32 %v1051, 0.125
    %v1060 = vmul.f32 %v1058, 0.125
    %v1061 = vmul.f32 %v1059, %v1059
    %v1062 = vsub.f32 %v1060, %v1061
    %v1063 = vmax.f32 %v1062, 0.0
    %v1064 = vadd.f32 %v1063, 1e-05
    %v1065 = vrsqrt.pop %v1064
    %v1066 = vsub.f32 0.0, %v1059
    %v1067 = vmul.f32 %v1066, %v1065
    %v1068 = vmul.f32 %v1041, %v1065
    %v1069 = vadd.f32 %v1068, %v1067
    %1070 = vst [vmem:[#allocation8] sm:$0xff] %v1069
    // Predicated region
    $region30: #{classifier_forward.1} parent=1 // pred_check
      _
    $region31: #{classifier_forward.1} parent=1 // pred_check_branch
      %1072 = sbr.rel (0) target = $region33
    $region32: #{classifier_forward.1} parent=1 // pred_region
      %s1074 = ssub.s32 128, 128
      %1075 = vsyncadd [#allocation4], %s1074
      %s1077 = sshll.u32 [#allocation8], 4
      %s1078 = int_to_ptr.vmem [resolvable:$true] %s1077
      %1080 = dma.vmem_to_hbm [thread:$0]  %s1078, 128, %s4, [#allocation4]
    $region33: #{classifier_forward.1} parent=1 // pred_fallthru
      _
    // Predicated region
    $region34: #{classifier_forward.1} parent=1 // pred_check
      _
    $region35: #{classifier_forward.1} parent=1 // pred_check_branch
      %1082 = sbr.rel (0) target = $region37
    $region36: #{classifier_forward.1} parent=1 // pred_region
      %1083 = dma.done [#allocation4], 128
    $region37: #{classifier_forward.1} parent=1 // pred_fallthru
      _
    %1084 = vsyncpa [#allocation3], 1
    %1085 = vsyncpa [#allocation6], 1
    %1086 = vsyncpa [#allocation4], 1

</llo_original>
